<compile_context>
chip_gen: v7x
topology: tpu7x:2x2x1
jax: 0.10.0
libtpu: 0.0.40
codegen_flags: <defaults>
</compile_context>

<pallas_src>
import functools
import math

import jax
import jax.numpy as jnp
from jax.experimental import pallas as pl
from jax.experimental.pallas import tpu as pltpu

_INV_SQRT2 = 1.0 / math.sqrt(2.0)
_BN_EPS = 1e-5


def _conv_stats_kernel(x_ref, w_ref, y_ref, stats_ref):
    """Circular Conv1d(k=3) as three accumulating MXU matmuls + per-block BN partial sums.

    x_ref: (NB, T, d) f32 (un-padded channels), w_ref: (3, d, Dp) bf16,
    y_ref: (NB*T, Dp) bf16, stats_ref: (1, 2, Dp) f32.
    """
    nb, t, d = x_ref.shape
    dp = w_ref.shape[-1]

    # bf16 MXU operands (cast in-kernel; input never materialized padded/bf16 in HBM).
    xb = x_ref[...].astype(jnp.bfloat16).reshape(nb * t, d)

    # Per-tap partials, f32 accumulation:  p_k[t] = W_k @ x[t]
    p0 = jnp.dot(xb, w_ref[0], preferred_element_type=jnp.float32)   # tap for x[t-1]
    p1 = jnp.dot(xb, w_ref[1], preferred_element_type=jnp.float32)   # tap for x[t]
    p2 = jnp.dot(xb, w_ref[2], preferred_element_type=jnp.float32)   # tap for x[t+1]

    # Circular shift on the f32 *outputs* (XLU sublane roll per split):
    #   y[t] = p0[t-1] + p1[t] + p2[t+1]
    p0 = pltpu.roll(p0.reshape(nb, t, dp), shift=1, axis=1)
    p2 = pltpu.roll(p2.reshape(nb, t, dp), shift=t - 1, axis=1)
    y = (p1.reshape(nb, t, dp) + p0 + p2).reshape(nb * t, dp)        # f32
    # NOTE: conv bias is omitted on purpose -- a per-channel constant is exactly cancelled
    # by the training-mode BatchNorm mean subtraction that follows.

    # Single-pass BN statistics in f32, taken BEFORE the bf16 downcast.
    s = jnp.sum(y, axis=0, keepdims=True)                            # (1, Dp)
    ss = jnp.sum(y * y, axis=0, keepdims=True)                       # (1, Dp)
    stats_ref[...] = jnp.concatenate([s, ss], axis=0)[None]          # (1, 2, Dp)

    # bf16 intermediate: halves the dominant HBM writeback + pass-2 re-read.
    y_ref[...] = y.astype(jnp.bfloat16)


def _bn_gelu_pool_kernel(y_ref, scale_ref, shift_ref, o_ref, *, t_out):
    """Fused BN affine + exact GELU + MaxPool1d(k=3, s=2, p=1) along T (T even).

    y_ref: (R_out, 2*Dp) bf16 -- adjacent timesteps lane-concatenated (free reshape),
    o_ref: (R_out, Dp) f32.
    """
    r_out, dp2 = y_ref.shape
    dp = dp2 // 2
    scale = scale_ref[...]                                           # (1, Dp) f32
    shift = shift_ref[...]                                           # (1, Dp) f32

    def act(v):
        v = v.astype(jnp.float32) * scale + shift
        return 0.5 * v * (1.0 + jax.lax.erf(v * _INV_SQRT2))         # exact GELU

    # Tile-aligned lane slices (Dp is a multiple of 128): plain unmasked loads.
    z_c = act(y_ref[:, :dp])                                         # z[2t]
    z_r = act(y_ref[:, dp:])                                         # z[2t+1]
    # Left neighbour z[2t-1] is z_r shifted down one pooled row; the first pooled row of
    # every split sees the -inf pool padding (mask generated in-kernel, no extra input).
    row = jax.lax.broadcasted_iota(jnp.int32, (r_out, dp), 0)
    z_l = jnp.where(row % t_out == 0, -jnp.inf, pltpu.roll(z_r, shift=1, axis=0))
    o_ref[...] = jnp.maximum(jnp.maximum(z_c, z_r), z_l)


def _vmem_budget():
    """(scoped-VMEM limit, per-grid-step block budget) -- chip aware when possible,
    otherwise sized for the smallest current generation (v7x: 64 MiB/TC)."""
    cap = 64 * 1024 * 1024
    try:
        cap = int(pltpu.get_tpu_info().vmem_capacity_bytes)
    except Exception:
        pass
    limit = min(max(cap * 3 // 4, 32 * 1024 * 1024), 96 * 1024 * 1024)
    return limit, limit // 3


def _pick_block_rows(n, t, d, dp, block_budget_bytes):
    """Rows-per-block NB (a divisor of N).  Constraints:
      * (NB*T) % 16 == 0 so every pass-1/pass-2 sub-block stays (8,128)-aligned,
      * estimated per-step VMEM (2x-buffered f32 input, 2x-buffered bf16 y, in-kernel
        f32 partials/temps ~= NB*T*(10*d + 16*Dp) bytes) fits the budget,
      * prefer g = N/NB >= 2 so the 'parallel' axis can shard across v7x's two TCs
        and DMA pipelines behind compute."""
    per_row = 10 * d + 16 * dp
    divs = [dd for dd in range(1, n + 1) if n % dd == 0 and (dd * t) % 16 == 0]
    if not divs:
        return n                                     # single full block (always legal)
    fit = [dd for dd in divs if dd * t * per_row <= block_budget_bytes]
    if not fit:
        return min(divs)                             # smallest aligned block
    pipelined = [dd for dd in fit if n // dd >= 2]
    return max(pipelined) if pipelined else max(fit)


def conv_block_forward(x, params, *, split_length):
    """x: (batch, sl*len, d_model) -> (batch, sl*len_out, d_model). Training-mode BN."""
    b, l, d = x.shape
    assert l % split_length == 0
    t = l // split_length
    assert t >= 4 and t % 2 == 0, "kernel assumes an even number of timesteps per split"
    n = b * split_length
    t_out = t // 2                                   # MaxPool1d(k=3, s=2, p=1), T even
    dp = ((d + 127) // 128) * 128                    # output channels padded to lane width

    w, gamma, beta = params["w"], params["gamma"], params["beta"]

    # Per-tap (C_in, C_out) weights, output channels zero-padded to Dp: (3, d, Dp) bf16.
    w_taps = jnp.transpose(w, (2, 1, 0))             # (3, C_in, C_out)
    w_taps = jnp.pad(w_taps, ((0, 0), (0, 0), (0, dp - d))).astype(jnp.bfloat16)
    gamma_p = jnp.zeros((dp,), jnp.float32).at[:d].set(gamma)
    beta_p = jnp.zeros((dp,), jnp.float32).at[:d].set(beta)

    # 'batch (sl len) d -> (batch sl) len d'.  Kept f32 and un-padded: the bf16 cast and
    # channel padding are fused into pass 1 (no inflated HBM copy of the input).
    xk = x.reshape(n, t, d)

    vmem_limit, blk_budget = _vmem_budget()
    nb = _pick_block_rows(n, t, d, dp, blk_budget)
    g = n // nb
    cparams = pltpu.CompilerParams(
        dimension_semantics=("parallel",),           # shards blocks across TCs on v7x
        vmem_limit_bytes=vmem_limit,
    )

    # ---- pass 1: circular conv (3 accumulating MXU matmuls) + partial BN stats ----
    cost1 = pl.CostEstimate(
        flops=2 * n * t * 3 * d * dp + 6 * n * t * dp,
        transcendentals=0,
        bytes_accessed=n * t * d * 4 + 3 * d * dp * 2 + n * t * dp * 2 + g * 2 * dp * 4,
    )
    y, part = pl.pallas_call(
        _conv_stats_kernel,
        out_shape=(
            jax.ShapeDtypeStruct((n * t, dp), jnp.bfloat16),  # conv output, bf16
            jax.ShapeDtypeStruct((g, 2, dp), jnp.float32),    # per-block (sum, sumsq)
        ),
        grid=(g,),
        in_specs=[
            pl.BlockSpec((nb, t, d), lambda i: (i, 0, 0)),
            pl.BlockSpec((3, d, dp), lambda i: (0, 0, 0)),
        ],
        out_specs=(
            pl.BlockSpec((nb * t, dp), lambda i: (i, 0)),
            pl.BlockSpec((1, 2, dp), lambda i: (i, 0, 0)),
        ),
        compiler_params=cparams,
        cost_estimate=cost1,
    )(xk, w_taps)

    # ---- fold BN (training-mode, biased variance) into one per-channel scale/shift ----
    cnt = float(n * t)
    stats = jnp.sum(part, axis=0)                    # (2, Dp) f32
    mean = stats[0] / cnt
    var = jnp.maximum(stats[1] / cnt - mean * mean, 0.0)
    scale = gamma_p * jax.lax.rsqrt(var + _BN_EPS)
    shift = beta_p - mean * scale

    # ---- pass 2: BN affine + exact GELU + lane-sliced max-pool ----
    # Free row-major re-view: row r now holds timesteps (2r, 2r+1) lane-concatenated.
    y2 = y.reshape(n * t_out, 2 * dp)
    cost2 = pl.CostEstimate(
        flops=10 * n * t * dp,
        transcendentals=n * t * dp,
        bytes_accessed=n * t * dp * 2 + n * t_out * dp * 4 + 2 * dp * 4,
    )
    out = pl.pallas_call(
        functools.partial(_bn_gelu_pool_kernel, t_out=t_out),
        out_shape=jax.ShapeDtypeStruct((n * t_out, dp), jnp.float32),
        grid=(g,),
        in_specs=[
            pl.BlockSpec((nb * t_out, 2 * dp), lambda i: (i, 0)),
            pl.BlockSpec((1, dp), lambda i: (0, 0)),
            pl.BlockSpec((1, dp), lambda i: (0, 0)),
        ],
        out_specs=pl.BlockSpec((nb * t_out, dp), lambda i: (i, 0)),
        compiler_params=cparams,
        cost_estimate=cost2,
    )(y2, scale.reshape(1, dp), shift.reshape(1, dp))

    # '(batch sl) len_out d -> batch (sl len_out) d' and drop channel padding.
    return out.reshape(b, split_length * t_out, dp)[:, :, :d]


def conv_block_reference(x, params, *, split_length):
    """Pure-JAX reference mirroring the PyTorch forward (training-mode BatchNorm).
    Conv operands are cast to bf16 (f32 accumulation) to match the kernel's MXU precision."""
    b, l, d = x.shape
    t = l // split_length
    n = b * split_length
    w, bias, gamma, beta = params["w"], params["b"], params["gamma"], params["beta"]

    xk = x.reshape(n, t, d).astype(jnp.bfloat16)
    xm1 = jnp.roll(xk, 1, axis=1)
    xp1 = jnp.roll(xk, -1, axis=1)

    def tap(v, k):
        return jnp.dot(v.reshape(n * t, d), w[:, :, k].T.astype(jnp.bfloat16),
                       preferred_element_type=jnp.float32)

    y = (tap(xm1, 0) + tap(xk, 1) + tap(xp1, 2)).reshape(n, t, d) + bias
    mean = y.mean(axis=(0, 1))
    var = ((y - mean) ** 2).mean(axis=(0, 1))
    y = (y - mean) / jnp.sqrt(var + _BN_EPS) * gamma + beta
    y = jax.nn.gelu(y, approximate=False)
    yp = jnp.pad(y, ((0, 0), (1, 1), (0, 0)), constant_values=-jnp.inf)
    t_out = (t + 2 - 3) // 2 + 1
    pooled = jnp.stack(
        [jnp.max(yp[:, 2 * i:2 * i + 3, :], axis=1) for i in range(t_out)], axis=1)
    return pooled.reshape(b, split_length * t_out, d)


if __name__ == "__main__":
    batch, sl, T, d_model = 2, 2, 16, 32
    L = sl * T

    key = jax.random.PRNGKey(0)
    k1, k2, k3, k4, k5 = jax.random.split(key, 5)

    # Deterministic parameter init (shapes from nn.Conv1d(d_model, d_model, 3) + BatchNorm1d).
    fan_in = d_model * 3
    bound = 1.0 / math.sqrt(fan_in)
    params = dict(
        w=jax.random.uniform(k1, (d_model, d_model, 3), jnp.float32, -bound, bound),
        b=jax.random.uniform(k2, (d_model,), jnp.float32, -bound, bound),
        gamma=1.0 + 0.1 * jax.random.normal(k3, (d_model,), jnp.float32),
        beta=0.1 * jax.random.normal(k4, (d_model,), jnp.float32),
    )
    x = jax.random.normal(k5, (batch, L, d_model), jnp.float32)

    out = jax.block_until_ready(conv_block_forward(x, params, split_length=sl))

    ref = conv_block_reference(x, params, split_length=sl)
    assert out.shape == (batch, sl * 8, d_model), out.shape
    max_err = float(jnp.max(jnp.abs(out - ref)))
    # bf16 MXU operands everywhere + bf16 storage of the conv intermediate (BN stats stay
    # f32-exact); the bf16 rounding of y before the affine+GELU bounds the error ~1e-2.
    if max_err > 3e-2:
        raise AssertionError(f"kernel/reference mismatch: max abs err = {max_err}")

    # TODO(synk): BatchNorm running_mean/var buffer updates (training side effect) are not
    # materialized; only the forward output (batch statistics) is produced.
    print("KERNEL_OK")
</pallas_src>

<mosaic_0001>
module attributes {stable_mosaic.version = 11 : i64} {
  func.func @_conv_stats_kernel(%arg0: i32, %arg1: memref<2x16x32xf32, #tpu.memory_space<vmem>>, %arg2: memref<3x32x128xbf16, #tpu.memory_space<vmem>>, %arg3: memref<32x128xbf16, #tpu.memory_space<vmem>>, %arg4: memref<1x2x128xf32, #tpu.memory_space<vmem>>) attributes {dimension_semantics = [#tpu.dimension_semantics<parallel>], iteration_bounds = array<i64: 2>, scalar_prefetch = 0 : i64, scratch_operands = 0 : i64, tpu.core_type = #tpu.core_type<tc>, window_params = [{transform_indices = @transform_0, window_bounds = array<i64: 2, 16, 32>}, {pipeline_mode = #tpu.pipeline_mode<synchronous>, transform_indices = @transform_1, window_bounds = array<i64: 3, 32, 128>}, {transform_indices = @transform_2, window_bounds = array<i64: 32, 128>}, {transform_indices = @transform_3, window_bounds = array<i64: 1, 2, 128>}]} {
    %c0 = arith.constant 0 : index
    %c0_0 = arith.constant 0 : index
    %c0_1 = arith.constant 0 : index
    %0 = vector.load %arg1[%c0, %c0_0, %c0_1] : memref<2x16x32xf32, #tpu.memory_space<vmem>>, vector<2x16x32xf32>
    %1 = arith.truncf %0 : vector<2x16x32xf32> to vector<2x16x32xbf16>
    %2 = vector.shape_cast %1 : vector<2x16x32xbf16> to vector<32x32xbf16>
    %c0_2 = arith.constant 0 : index
    %c0_3 = arith.constant 0 : index
    %c0_4 = arith.constant 0 : index
    %3 = vector.load %arg2[%c0_2, %c0_3, %c0_4] : memref<3x32x128xbf16, #tpu.memory_space<vmem>>, vector<1x32x128xbf16>
    %4 = vector.shape_cast %3 : vector<1x32x128xbf16> to vector<32x128xbf16>
    %cst = arith.constant dense<0.000000e+00> : vector<32x128xf32>
    %5 = tpu.matmul %2, %4, %cst {dimension_numbers = #tpu.dot_dimension_numbers<[1], [0], [0], [1], [0, 0, 1, 1], [], []>} : vector<32x32xbf16>, vector<32x128xbf16>, vector<32x128xf32> -> vector<32x128xf32>
    %c1 = arith.constant 1 : index
    %c0_5 = arith.constant 0 : index
    %c0_6 = arith.constant 0 : index
    %6 = vector.load %arg2[%c1, %c0_5, %c0_6] : memref<3x32x128xbf16, #tpu.memory_space<vmem>>, vector<1x32x128xbf16>
    %7 = vector.shape_cast %6 : vector<1x32x128xbf16> to vector<32x128xbf16>
    %cst_7 = arith.constant dense<0.000000e+00> : vector<32x128xf32>
    %8 = tpu.matmul %2, %7, %cst_7 {dimension_numbers = #tpu.dot_dimension_numbers<[1], [0], [0], [1], [0, 0, 1, 1], [], []>} : vector<32x32xbf16>, vector<32x128xbf16>, vector<32x128xf32> -> vector<32x128xf32>
    %c2 = arith.constant 2 : index
    %c0_8 = arith.constant 0 : index
    %c0_9 = arith.constant 0 : index
    %9 = vector.load %arg2[%c2, %c0_8, %c0_9] : memref<3x32x128xbf16, #tpu.memory_space<vmem>>, vector<1x32x128xbf16>
    %10 = vector.shape_cast %9 : vector<1x32x128xbf16> to vector<32x128xbf16>
    %cst_10 = arith.constant dense<0.000000e+00> : vector<32x128xf32>
    %11 = tpu.matmul %2, %10, %cst_10 {dimension_numbers = #tpu.dot_dimension_numbers<[1], [0], [0], [1], [0, 0, 1, 1], [], []>} : vector<32x32xbf16>, vector<32x128xbf16>, vector<32x128xf32> -> vector<32x128xf32>
    %12 = vector.shape_cast %5 : vector<32x128xf32> to vector<2x16x128xf32>
    %c1_i32 = arith.constant 1 : i32
    %13 = tpu.dynamic_rotate %12 by %c1_i32 dim 1 : vector<2x16x128xf32>, i32 -> vector<2x16x128xf32>
    %14 = vector.shape_cast %11 : vector<32x128xf32> to vector<2x16x128xf32>
    %c15_i32 = arith.constant 15 : i32
    %15 = tpu.dynamic_rotate %14 by %c15_i32 dim 1 : vector<2x16x128xf32>, i32 -> vector<2x16x128xf32>
    %16 = vector.shape_cast %8 : vector<32x128xf32> to vector<2x16x128xf32>
    %17 = arith.addf %16, %13 : vector<2x16x128xf32>
    %18 = arith.addf %17, %15 : vector<2x16x128xf32>
    %19 = vector.shape_cast %18 : vector<2x16x128xf32> to vector<32x128xf32>
    %cst_11 = arith.constant dense<0.000000e+00> : vector<128xf32>
    %20 = vector.multi_reduction <add>, %19, %cst_11 [0] : vector<32x128xf32> to vector<128xf32>
    %21 = vector.shape_cast %20 : vector<128xf32> to vector<1x128xf32>
    %22 = arith.mulf %19, %19 : vector<32x128xf32>
    %cst_12 = arith.constant dense<0.000000e+00> : vector<128xf32>
    %23 = vector.multi_reduction <add>, %22, %cst_12 [0] : vector<32x128xf32> to vector<128xf32>
    %24 = vector.shape_cast %23 : vector<128xf32> to vector<1x128xf32>
    %25 = tpu.concatenate %21, %24 in 0 : vector<1x128xf32>, vector<1x128xf32> -> vector<2x128xf32>
    %26 = vector.shape_cast %25 : vector<2x128xf32> to vector<1x2x128xf32>
    %c0_13 = arith.constant 0 : index
    %c0_14 = arith.constant 0 : index
    %c0_15 = arith.constant 0 : index
    %27 = vector.load %arg4[%c0_13, %c0_14, %c0_15] : memref<1x2x128xf32, #tpu.memory_space<vmem>>, vector<1x2x128xf32>
    tpu.vector_store %arg4[%c0_13, %c0_14, %c0_15], %26 {strides = array<i32>} : memref<1x2x128xf32, #tpu.memory_space<vmem>>, vector<1x2x128xf32>,
    %28 = arith.truncf %19 : vector<32x128xf32> to vector<32x128xbf16>
    %c0_16 = arith.constant 0 : index
    %c0_17 = arith.constant 0 : index
    %29 = vector.load %arg3[%c0_16, %c0_17] : memref<32x128xbf16, #tpu.memory_space<vmem>>, vector<32x128xbf16>
    tpu.vector_store %arg3[%c0_16, %c0_17], %28 {strides = array<i32>} : memref<32x128xbf16, #tpu.memory_space<vmem>>, vector<32x128xbf16>,
    return
  }
  func.func @transform_0(%arg0: i32) -> (i32, i32, i32) {
    %c0_i32 = arith.constant 0 : i32
    %c0_i32_0 = arith.constant 0 : i32
    %c0_i32_1 = arith.constant 0 : i32
    return %arg0, %c0_i32, %c0_i32_0 : i32, i32, i32
  }
  func.func @transform_1(%arg0: i32) -> (i32, i32, i32) {
    %c0_i32 = arith.constant 0 : i32
    %c0_i32_0 = arith.constant 0 : i32
    %c0_i32_1 = arith.constant 0 : i32
    %c0_i32_2 = arith.constant 0 : i32
    return %c0_i32, %c0_i32_0, %c0_i32_1 : i32, i32, i32
  }
  func.func @transform_2(%arg0: i32) -> (i32, i32) {
    %c0_i32 = arith.constant 0 : i32
    %c0_i32_0 = arith.constant 0 : i32
    return %arg0, %c0_i32 : i32, i32
  }
  func.func @transform_3(%arg0: i32) -> (i32, i32, i32) {
    %c0_i32 = arith.constant 0 : i32
    %c0_i32_0 = arith.constant 0 : i32
    %c0_i32_1 = arith.constant 0 : i32
    return %arg0, %c0_i32, %c0_i32_0 : i32, i32, i32
  }
}

</mosaic_0001>

<llo_original>
// kernel: tpu_custom_call.1
$region0: #{tpu_custom_call.1}
  #allocation0 [shape = 'u32[]', space=smem, size = 0x4, offset = 0x4, fixed_abs, tag = 'smem constant byte address 0x4 - core index']
  #allocation1 [shape = 'u32[144,128]{1,0:T(1,128)}', space=vmem, size = 0x12000, scoped, tag = 'internal scratch']
  %s0 = inlined_call_operand.hbm [shape: f32[4,16,32], index: 0, kind: input, shape index: {}]
  %s1 = inlined_call_operand.hbm [shape: bf16[3,32,128], index: 1, kind: input, shape index: {}]
  %s2 = inlined_call_operand.hbm [shape: bf16[64,128], index: 2, kind: output, shape index: {0}]
  %s3 = inlined_call_operand.hbm [shape: f32[2,2,128], index: 3, kind: output, shape index: {1}]
  %4 = xla_tuple %s2, %s3
  %s5 = sld [smem:[#allocation0]]
  $region57: #{tpu_custom_call.1} parent=0
    _
  %s7 = ssub.s32 1, %s5
  %s8 = scalar_select 0, %s7, %s5
  $region1: #{tpu_custom_call.1} parent=0
    #allocation2 [shape = 'u8[32768]{0}', space=vmem, size = 0x8000, scoped, tag = 'input window, operand 0']
    #allocation3 [shape = 's32[2]{0}', space=sflag, size = 0x8, scoped, tag = 'scoped memory for tpu_custom_call.1']
    #allocation4 [shape = 's32[2]{0}', space=sflag, size = 0x8, scoped, tag = 'scoped memory for tpu_custom_call.1']
    #allocation5 [shape = 'u8[24576]{0}', space=vmem, size = 0x6000, scoped, tag = 'input window, operand 1, single buffered']
    #allocation6 [shape = 's32[1]{0}', space=sflag, size = 0x4, scoped, tag = 'scoped memory for tpu_custom_call.1']
    #allocation7 [shape = 'u8[16384]{0}', space=vmem, size = 0x4000, scoped, tag = 'output window, operand 0']
    #allocation8 [shape = 'u8[2048]{0}', space=vmem, size = 0x800, scoped, tag = 'output window, operand 1']
    #allocation9 [shape = 's32[2]{0}', space=sflag, size = 0x8, scoped, tag = 'scoped memory for tpu_custom_call.1']
    %9 = vsyncpa [#allocation3], 0
    %s10 = scalar_lea.sflag [#allocation3], 1
    %11 = vsyncpa %s10, 0
    %12 = vsyncpa [#allocation6], 0
    %13 = vsyncpa [#allocation4], 0
    %s14 = scalar_lea.sflag [#allocation4], 1
    %15 = vsyncpa %s14, 0
    %16 = vsyncpa [#allocation9], 0
    %s17 = scalar_lea.sflag [#allocation9], 1
    %18 = vsyncpa %s17, 0
    loop: start=0, step=1, limit=4
    $region2: #{tpu_custom_call.1} parent=1 // loop_pre_header
      _
    $region3: #{tpu_custom_call.1} parent=1 // loop_header
      %s20 = sphi 0, %s24
      %p21 = scmp.ge.s32.totalorder %s20, 4
      %s30 = sphi 0, %s32
      %s33 = sphi 0, %s30
      %s34 = sphi 0, %s33
      %s50 = sphi 0, %s34
      %s54 = sphi 0, %s54
      %s56 = sphi 0, %s54
      %s57 = sphi 0, %s56
      %s71 = sphi 0, %s57
      %s77 = sphi 0, %s79
      %s80 = sphi 0, %s77
      %s81 = sphi 0, %s80
      %s97 = sphi 0, %s81
      %s103 = sphi 0, %s105
      %s106 = sphi 0, %s103
      %s107 = sphi 0, %s106
      %s123 = sphi 0, %s107
    $region4: #{tpu_custom_call.1} parent=1 // loop_header_branch
      %23 = sbr.rel (%p21) target = $region8
    $region5: #{tpu_custom_call.1} parent=1 // loop_body
      %s25 = ssub.s32 %s20, 1
      %s26 = ssub.s32 %s20, 2
      %s27 = sadd.s32 %s20, 1
      %s28 = ssub.s32 %s20, %s27
      %p29 = scmp.eq.s32.totalorder %s28, 0
      %s31 = sadd.s32 %s30, 1
      %s32 = scalar_select %p29, %s30, %s31
      %p35 = pneg %p29
      %p36 = scmp.eq.s32.totalorder %s20, 1
      %p37 = por %p35, %p36
      %p38 = scmp.ne.s32.totalorder %s30, %s33
      %p39 = scmp.eq.s32.totalorder %s20, 0
      %p40 = por %p38, %p39
      %p41 = scmp.ne.s32.totalorder %s30, %s33
      %p42 = scmp.eq.s32.totalorder %s25, 1
      %p43 = por %p41, %p42
      %p44 = scmp.ne.s32.totalorder %s33, %s34
      %p45 = scmp.eq.s32.totalorder %s25, 0
      %p46 = por %p44, %p45
      %p47 = scmp.ne.s32.totalorder %s33, %s34
      %p48 = scmp.eq.s32.totalorder %s26, 1
      %p49 = por %p47, %p48
      %p51 = scmp.ne.s32.totalorder %s34, %s50
      %p52 = scmp.eq.s32.totalorder %s26, 0
      %p53 = por %p51, %p52
      %s55 = sadd.s32 %s54, 1
      %p58 = scmp.eq.s32.totalorder %s20, 1
      %p59 = scmp.ne.s32.totalorder %s54, %s56
      %p60 = scmp.eq.s32.totalorder %s20, 0
      %p61 = por %p59, %p60
      %p62 = scmp.ne.s32.totalorder %s54, %s56
      %p63 = scmp.eq.s32.totalorder %s25, 1
      %p64 = por %p62, %p63
      %p65 = scmp.ne.s32.totalorder %s56, %s57
      %p66 = scmp.eq.s32.totalorder %s25, 0
      %p67 = por %p65, %p66
      %p68 = scmp.ne.s32.totalorder %s56, %s57
      %p69 = scmp.eq.s32.totalorder %s26, 1
      %p70 = por %p68, %p69
      %p72 = scmp.ne.s32.totalorder %s57, %s71
      %p73 = scmp.eq.s32.totalorder %s26, 0
      %p74 = por %p72, %p73
      %s75 = ssub.s32 %s20, %s27
      %p76 = scmp.eq.s32.totalorder %s75, 0
      %s78 = sadd.s32 %s77, 1
      %s79 = scalar_select %p76, %s77, %s78
      %p82 = pneg %p76
      %p83 = scmp.eq.s32.totalorder %s20, 1
      %p84 = por %p82, %p83
      %p85 = scmp.ne.s32.totalorder %s77, %s80
      %p86 = scmp.eq.s32.totalorder %s20, 0
      %p87 = por %p85, %p86
      %p88 = scmp.ne.s32.totalorder %s77, %s80
      %p89 = scmp.eq.s32.totalorder %s25, 1
      %p90 = por %p88, %p89
      %p91 = scmp.ne.s32.totalorder %s80, %s81
      %p92 = scmp.eq.s32.totalorder %s25, 0
      %p93 = por %p91, %p92
      %p94 = scmp.ne.s32.totalorder %s80, %s81
      %p95 = scmp.eq.s32.totalorder %s26, 1
      %p96 = por %p94, %p95
      %p98 = scmp.ne.s32.totalorder %s81, %s97
      %p99 = scmp.eq.s32.totalorder %s26, 0
      %p100 = por %p98, %p99
      %s101 = ssub.s32 %s20, %s27
      %p102 = scmp.eq.s32.totalorder %s101, 0
      %s104 = sadd.s32 %s103, 1
      %s105 = scalar_select %p102, %s103, %s104
      %p108 = pneg %p102
      %p109 = scmp.eq.s32.totalorder %s20, 1
      %p110 = por %p108, %p109
      %p111 = scmp.ne.s32.totalorder %s103, %s106
      %p112 = scmp.eq.s32.totalorder %s20, 0
      %p113 = por %p111, %p112
      %p114 = scmp.ne.s32.totalorder %s103, %s106
      %p115 = scmp.eq.s32.totalorder %s25, 1
      %p116 = por %p114, %p115
      %p117 = scmp.ne.s32.totalorder %s106, %s107
      %p118 = scmp.eq.s32.totalorder %s25, 0
      %p119 = por %p117, %p118
      %p120 = scmp.ne.s32.totalorder %s106, %s107
      %p121 = scmp.eq.s32.totalorder %s26, 1
      %p122 = por %p120, %p121
      %p124 = scmp.ne.s32.totalorder %s107, %s123
      %p125 = scmp.eq.s32.totalorder %s26, 0
      %p126 = por %p124, %p125
      %p127 = scmp.le.s32.totalorder 1, %s20
      %p128 = scmp.lt.s32.totalorder %s20, 3
      %p129 = pnand %p127, %p128
      %p130 = pneg %p129
      // Predicated region
      $region9: #{tpu_custom_call.1} parent=5 // pred_check
        _
      $region10: #{tpu_custom_call.1} parent=5 // pred_check_branch
        %132 = sbr.rel (%p129) target = $region12
      $region11: #{tpu_custom_call.1} parent=5 // pred_region
        %s133 = ssub.s32 %s20, 1
        // Predicated region
        $region13: #{tpu_custom_call.1} parent=11 // pred_check
          %p134 = pneg %p67
        $region14: #{tpu_custom_call.1} parent=11 // pred_check_branch
          %136 = sbr.rel (%p134) target = $region16
        $region15: #{tpu_custom_call.1} parent=11 // pred_region
          %s138 = ssub.s32 768, 768
          %139 = vsyncadd [#allocation6], %s138
          %s140 = sshll.u32 [#allocation5], 4
          %s141 = int_to_ptr.vmem [resolvable:$true] %s140
          %146 = dma.hbm_to_vmem [thread:$0]  %s1, 768, %s141, [#allocation6], 64, 64, 4
        $region16: #{tpu_custom_call.1} parent=11 // pred_fallthru
          _
      $region12: #{tpu_custom_call.1} parent=5 // pred_fallthru
        _
      %p147 = scmp.lt.s32.totalorder %s20, 2
      // Predicated region
      $region17: #{tpu_custom_call.1} parent=5 // pred_check
        %p148 = pneg %p147
      $region18: #{tpu_custom_call.1} parent=5 // pred_check_branch
        %150 = sbr.rel (%p148) target = $region20
      $region19: #{tpu_custom_call.1} parent=5 // pred_region
        // Predicated region
        $region21: #{tpu_custom_call.1} parent=19 // pred_check
          %p151 = pneg %p40
        $region22: #{tpu_custom_call.1} parent=19 // pred_check_branch
          %153 = sbr.rel (%p151) target = $region24
        $region23: #{tpu_custom_call.1} parent=19 // pred_region
          %s154 = sand.u32 %s30, 1
          %s155 = scalar_lea.sflag [#allocation3], %s154
          %s156 = sand.u32 %s30, 1
          %s157 = smul.addr %s156, 32
          %s158 = scalar_lea.vmem [#allocation2], %s157
          %s159 = smul.u32 2, %s20
          %s161 = ssub.s32 512, 512
          %162 = vsyncadd %s155, %s161
          %s163 = smul.addr %s159, 2
          %s164 = smul.addr %s163, 128
          %s165 = scalar_lea.hbm %s0, %s164
          %s166 = sshll.u32 %s158, 4
          %s167 = int_to_ptr.vmem [resolvable:$true] %s166
          %172 = dma.hbm_to_vmem [thread:$0]  %s165, 512, %s167, %s155, 128, 128, 8
        $region24: #{tpu_custom_call.1} parent=19 // pred_fallthru
          _
      $region20: #{tpu_custom_call.1} parent=5 // pred_fallthru
        _
      %p173 = scmp.le.s32.totalorder 1, %s20
      %p174 = scmp.lt.s32.totalorder %s20, 3
      %p175 = pnand %p173, %p174
      %p176 = pneg %p175
      // Predicated region
      $region25: #{tpu_custom_call.1} parent=5 // pred_check
        _
      $region26: #{tpu_custom_call.1} parent=5 // pred_check_branch
        %178 = sbr.rel (%p175) target = $region28
      $region27: #{tpu_custom_call.1} parent=5 // pred_region
        %s179 = ssub.s32 %s20, 1
        %s180 = sand.u32 %s33, 1
        %s181 = scalar_lea.sflag [#allocation3], %s180
        %s182 = sand.u32 %s33, 1
        %s183 = smul.addr %s182, 32
        %s184 = scalar_lea.vmem [#allocation2], %s183
        // Predicated region
        $region29: #{tpu_custom_call.1} parent=27 // pred_check
          %p185 = pneg %p46
        $region30: #{tpu_custom_call.1} parent=27 // pred_check_branch
          %187 = sbr.rel (%p185) target = $region32
        $region31: #{tpu_custom_call.1} parent=27 // pred_region
          %188 = dma.done %s181, 512
        $region32: #{tpu_custom_call.1} parent=27 // pred_fallthru
          _
        // Predicated region
        $region33: #{tpu_custom_call.1} parent=27 // pred_check
          %p189 = pneg %p67
        $region34: #{tpu_custom_call.1} parent=27 // pred_check_branch
          %191 = sbr.rel (%p189) target = $region36
        $region35: #{tpu_custom_call.1} parent=27 // pred_region
          %192 = dma.done [#allocation6], 768
        $region36: #{tpu_custom_call.1} parent=27 // pred_fallthru
          _
        %s193 = sand.u32 %s33, 1
        %s194 = scalar_lea.sflag [#allocation3], %s193
        %s195 = sand.u32 %s33, 1
        %s196 = smul.addr %s195, 32
        %s197 = scalar_lea.vmem [#allocation2], %s196
        %p198 = pneg %p46
        %p199 = pneg %p43
        %p200 = pneg %p67
        %p201 = pneg %p64
        %p202 = pneg %p93
        %p203 = pneg %p90
        %s204 = sand.u32 %s80, 1
        %s205 = scalar_lea.sflag [#allocation4], %s204
        %s206 = sand.u32 %s80, 1
        %s207 = smul.addr %s206, 16
        %s208 = scalar_lea.vmem [#allocation7], %s207
        %p209 = pneg %p119
        %p210 = pneg %p116
        %s211 = sand.u32 %s106, 1
        %s212 = scalar_lea.sflag [#allocation9], %s211
        %s213 = sand.u32 %s106, 1
        %s214 = smul.addr %s213, 2
        %s215 = scalar_lea.vmem [#allocation8], %s214
        %s216 = smul.u32 2, %s25
        %s217 = smul.u32 4, %s25
        %v219 = vld [vmem:[%s184] sm:$0xff]
        %v220 = vld [vmem:[%s184 + $0x8] sm:$0xff]
        %v221 = vld [vmem:[%s184 + $0x10] sm:$0xff]
        %v222 = vld [vmem:[%s184 + $0x18] sm:$0xff]
        %v223 = vpack.c.bf16 %v220, %v219
        %v224 = vpack.c.bf16 %v222, %v221
        %v225 = vld [vmem:[#allocation5] sm:$0xf]
        %v226 = vld [vmem:[#allocation5 + $0x4] sm:$0xf]
        %v227 = vld [vmem:[#allocation5 + $0x8] sm:$0xf]
        %v228 = vld [vmem:[#allocation5 + $0xc] sm:$0xf]
        %v233 = vunpack.c.l.b16 %v225
        %v234 = vunpack.c.l.b16 %v226
        %v235 = vunpack.c.l.b16 %v227
        %v236 = vunpack.c.l.b16 %v228
        %v237 = vpack.c.b16 %v234, %v233
        %v238 = vpack.c.b16 %v236, %v235
        %vm241 = vcmask 261120
        %v243 = vsel %vm241, %v223, 0
        %v246 = vsel %vm241, %v224, 0
        %248 = vmatprep.subr.bf16.mxu0 0
        %249 = vmatpush1.bf16.msra.mxu0 %v237
        %250 = vmatprep.subr.bf16.mxu0 0
        %251 = vmatpush1.bf16.msra.mxu0 %v238
        %252 = vmatprep.subr.bf16.mxu0 0
        %253 = vmatpush1.bf16.msra.mxu0 0
        %254 = vmatprep.subr.bf16.mxu0 0
        %255 = vmatpush1.bf16.msra.mxu0 0
        %256 = vmatprep.subr.bf16.mxu0 0
        %257 = vmatpush1.bf16.msra.mxu0 0
        %258 = vmatprep.subr.bf16.mxu0 0
        %259 = vmatpush1.bf16.msra.mxu0 0
        %260 = vmatprep.subr.bf16.mxu0 0
        %261 = vmatpush1.bf16.msra.mxu0 0
        %262 = vmatprep.subr.bf16.mxu0 0
        %263 = vmatpush1.bf16.msra.mxu0 0
        %264 = vmatprep.subr.bf16.mxu0 0
        %265 = vmatpush1.bf16.msra.mxu0 0
        %266 = vmatprep.subr.bf16.mxu0 0
        %267 = vmatpush1.bf16.msra.mxu0 0
        %268 = vmatprep.subr.bf16.mxu0 0
        %269 = vmatpush1.bf16.msra.mxu0 0
        %270 = vmatprep.subr.bf16.mxu0 0
        %271 = vmatpush1.bf16.msra.mxu0 0
        %272 = vmatprep.subr.bf16.mxu0 0
        %273 = vmatpush1.bf16.msra.mxu0 0
        %274 = vmatprep.subr.bf16.mxu0 0
        %275 = vmatpush1.bf16.msra.mxu0 0
        %276 = vmatprep.subr.bf16.mxu0 0
        %277 = vmatpush1.bf16.msra.mxu0 0
        %278 = vmatprep.subr.bf16.mxu0 0
        %279 = vmatpush1.bf16.msra.mxu0 0
        %280 = vmatprep.mubr.bf16.mxu0 0
        %281 = vmatmul.mubr.bf16.gmra.mrb[0].mxu0 %v243
        %v282 = vpop.f32.mrb[0].mxu0
        %v283 = vadd.f32 0.0, %v282
        %v284 = vpop.f32.mrb[0].mxu0
        %v285 = vpop.f32.mrb[0].mxu0
        %v286 = vadd.f32 0.0, %v285
        %v287 = vpop.f32.mrb[0].mxu0
        %288 = vmatprep.mubr.bf16.mxu0 0
        %289 = vmatmul.mubr.bf16.gmra.mrb[0].mxu0 %v246
        %v290 = vpop.f32.mrb[0].mxu0
        %v291 = vadd.f32 0.0, %v290
        %v292 = vpop.f32.mrb[0].mxu0
        %v293 = vpop.f32.mrb[0].mxu0
        %v294 = vadd.f32 0.0, %v293
        %v295 = vpop.f32.mrb[0].mxu0
        %296 = vdwg.mxu0
        %s297 = scalar_lea.vmem [#allocation5], 16
        %v298 = vld [vmem:[%s297] sm:$0xf]
        %v299 = vld [vmem:[%s297 + $0x4] sm:$0xf]
        %v300 = vld [vmem:[%s297 + $0x8] sm:$0xf]
        %v301 = vld [vmem:[%s297 + $0xc] sm:$0xf]
        %v306 = vunpack.c.l.b16 %v298
        %v307 = vunpack.c.l.b16 %v299
        %v308 = vunpack.c.l.b16 %v300
        %v309 = vunpack.c.l.b16 %v301
        %v310 = vpack.c.b16 %v307, %v306
        %v311 = vpack.c.b16 %v309, %v308
        %314 = vmatprep.subr.bf16.mxu0 0
        %315 = vmatpush1.bf16.msra.mxu0 %v310
        %316 = vmatprep.subr.bf16.mxu0 0
        %317 = vmatpush1.bf16.msra.mxu0 %v311
        %318 = vmatprep.subr.bf16.mxu0 0
        %319 = vmatpush1.bf16.msra.mxu0 0
        %320 = vmatprep.subr.bf16.mxu0 0
        %321 = vmatpush1.bf16.msra.mxu0 0
        %322 = vmatprep.subr.bf16.mxu0 0
        %323 = vmatpush1.bf16.msra.mxu0 0
        %324 = vmatprep.subr.bf16.mxu0 0
        %325 = vmatpush1.bf16.msra.mxu0 0
        %326 = vmatprep.subr.bf16.mxu0 0
        %327 = vmatpush1.bf16.msra.mxu0 0
        %328 = vmatprep.subr.bf16.mxu0 0
        %329 = vmatpush1.bf16.msra.mxu0 0
        %330 = vmatprep.subr.bf16.mxu0 0
        %331 = vmatpush1.bf16.msra.mxu0 0
        %332 = vmatprep.subr.bf16.mxu0 0
        %333 = vmatpush1.bf16.msra.mxu0 0
        %334 = vmatprep.subr.bf16.mxu0 0
        %335 = vmatpush1.bf16.msra.mxu0 0
        %336 = vmatprep.subr.bf16.mxu0 0
        %337 = vmatpush1.bf16.msra.mxu0 0
        %338 = vmatprep.subr.bf16.mxu0 0
        %339 = vmatpush1.bf16.msra.mxu0 0
        %340 = vmatprep.subr.bf16.mxu0 0
        %341 = vmatpush1.bf16.msra.mxu0 0
        %342 = vmatprep.subr.bf16.mxu0 0
        %343 = vmatpush1.bf16.msra.mxu0 0
        %344 = vmatprep.subr.bf16.mxu0 0
        %345 = vmatpush1.bf16.msra.mxu0 0
        %346 = vmatprep.mubr.bf16.mxu0 0
        %347 = vmatmul.mubr.bf16.gmra.mrb[0].mxu0 %v243
        %v348 = vpop.f32.mrb[0].mxu0
        %v349 = vadd.f32 0.0, %v348
        %v350 = vpop.f32.mrb[0].mxu0
        %v351 = vpop.f32.mrb[0].mxu0
        %v352 = vadd.f32 0.0, %v351
        %v353 = vpop.f32.mrb[0].mxu0
        %354 = vmatprep.mubr.bf16.mxu0 0
        %355 = vmatmul.mubr.bf16.gmra.mrb[0].mxu0 %v246
        %v356 = vpop.f32.mrb[0].mxu0
        %v357 = vadd.f32 0.0, %v356
        %v358 = vpop.f32.mrb[0].mxu0
        %v359 = vpop.f32.mrb[0].mxu0
        %v360 = vadd.f32 0.0, %v359
        %v361 = vpop.f32.mrb[0].mxu0
        %362 = vdwg.mxu0
        %s363 = scalar_lea.vmem [#allocation5], 32
        %v364 = vld [vmem:[%s363] sm:$0xf]
        %v365 = vld [vmem:[%s363 + $0x4] sm:$0xf]
        %v366 = vld [vmem:[%s363 + $0x8] sm:$0xf]
        %v367 = vld [vmem:[%s363 + $0xc] sm:$0xf]
        %v372 = vunpack.c.l.b16 %v364
        %v373 = vunpack.c.l.b16 %v365
        %v374 = vunpack.c.l.b16 %v366
        %v375 = vunpack.c.l.b16 %v367
        %v376 = vpack.c.b16 %v373, %v372
        %v377 = vpack.c.b16 %v375, %v374
        %380 = vmatprep.subr.bf16.mxu0 0
        %381 = vmatpush1.bf16.msra.mxu0 %v376
        %382 = vmatprep.subr.bf16.mxu0 0
        %383 = vmatpush1.bf16.msra.mxu0 %v377
        %384 = vmatprep.subr.bf16.mxu0 0
        %385 = vmatpush1.bf16.msra.mxu0 0
        %386 = vmatprep.subr.bf16.mxu0 0
        %387 = vmatpush1.bf16.msra.mxu0 0
        %388 = vmatprep.subr.bf16.mxu0 0
        %389 = vmatpush1.bf16.msra.mxu0 0
        %390 = vmatprep.subr.bf16.mxu0 0
        %391 = vmatpush1.bf16.msra.mxu0 0
        %392 = vmatprep.subr.bf16.mxu0 0
        %393 = vmatpush1.bf16.msra.mxu0 0
        %394 = vmatprep.subr.bf16.mxu0 0
        %395 = vmatpush1.bf16.msra.mxu0 0
        %396 = vmatprep.subr.bf16.mxu0 0
        %397 = vmatpush1.bf16.msra.mxu0 0
        %398 = vmatprep.subr.bf16.mxu0 0
        %399 = vmatpush1.bf16.msra.mxu0 0
        %400 = vmatprep.subr.bf16.mxu0 0
        %401 = vmatpush1.bf16.msra.mxu0 0
        %402 = vmatprep.subr.bf16.mxu0 0
        %403 = vmatpush1.bf16.msra.mxu0 0
        %404 = vmatprep.subr.bf16.mxu0 0
        %405 = vmatpush1.bf16.msra.mxu0 0
        %406 = vmatprep.subr.bf16.mxu0 0
        %407 = vmatpush1.bf16.msra.mxu0 0
        %408 = vmatprep.subr.bf16.mxu0 0
        %409 = vmatpush1.bf16.msra.mxu0 0
        %410 = vmatprep.subr.bf16.mxu0 0
        %411 = vmatpush1.bf16.msra.mxu0 0
        %412 = vmatprep.mubr.bf16.mxu0 0
        %413 = vmatmul.mubr.bf16.gmra.mrb[0].mxu0 %v243
        %v414 = vpop.f32.mrb[0].mxu0
        %v415 = vadd.f32 0.0, %v414
        %v416 = vpop.f32.mrb[0].mxu0
        %v417 = vpop.f32.mrb[0].mxu0
        %v418 = vadd.f32 0.0, %v417
        %v419 = vpop.f32.mrb[0].mxu0
        %420 = vmatprep.mubr.bf16.mxu0 0
        %421 = vmatmul.mubr.bf16.gmra.mrb[0].mxu0 %v246
        %v422 = vpop.f32.mrb[0].mxu0
        %v423 = vadd.f32 0.0, %v422
        %v424 = vpop.f32.mrb[0].mxu0
        %v425 = vpop.f32.mrb[0].mxu0
        %v426 = vadd.f32 0.0, %v425
        %v427 = vpop.f32.mrb[0].mxu0
        %428 = vdwg.mxu0
        %v429 = vrot.slane %v283, 7
        %v430 = vrot.slane %v291, 7
        %v431 = vrot.slane %v286, 7
        %v432 = vrot.slane %v294, 7
        %v433 = vlaneseq
        %v434 = vshrl.u32 %v433, 7
        %vm435 = vcmp.lt.s32.totalorder %v434, 1
        %v436 = vsel %vm435, %v429, %v431
        %v437 = vsel %vm435, %v430, %v432
        %v438 = vsel %vm435, %v431, %v429
        %v439 = vsel %vm435, %v432, %v430
        %v440 = vrot.slane %v415, 1
        %v441 = vrot.slane %v423, 1
        %v442 = vrot.slane %v418, 1
        %v443 = vrot.slane %v426, 1
        %vm444 = vcmp.lt.s32.totalorder %v434, 7
        %v445 = vsel %vm444, %v440, %v442
        %v446 = vsel %vm444, %v441, %v443
        %v447 = vsel %vm444, %v442, %v440
        %v448 = vsel %vm444, %v443, %v441
        %v449 = vadd.f32 %v349, %v438
        %v450 = vadd.f32 %v352, %v436
        %v451 = vadd.f32 %v357, %v439
        %v452 = vadd.f32 %v360, %v437
        %v453 = vadd.f32 %v449, %v445
        %v454 = vadd.f32 %v450, %v447
        %v455 = vadd.f32 %v451, %v446
        %v456 = vadd.f32 %v452, %v448
        %v457 = vadd.f32 %v453, %v454
        %v458 = vadd.f32 %v457, %v455
        %v459 = vadd.f32 %v458, %v456
        %v460 = vrot.slane %v459, 4
        %v461 = vadd.f32 %v459, %v460
        %v462 = vrot.slane %v461, 2
        %v463 = vadd.f32 %v461, %v462
        %v464 = vrot.slane %v463, 1
        %v465 = vadd.f32 %v463, %v464
        %v466 = vmul.f32 %v453, %v453
        %v467 = vmul.f32 %v454, %v454
        %v468 = vmul.f32 %v455, %v455
        %v469 = vmul.f32 %v456, %v456
        %v470 = vadd.f32 %v466, %v467
        %v471 = vadd.f32 %v470, %v468
        %v472 = vadd.f32 %v471, %v469
        %v473 = vrot.slane %v472, 4
        %v474 = vadd.f32 %v472, %v473
        %v475 = vrot.slane %v474, 2
        %v476 = vadd.f32 %v474, %v475
        %v477 = vrot.slane %v476, 1
        %v478 = vadd.f32 %v476, %v477
        %vm479 = vcmask 1040384
        %v480 = vsel %vm479, %v465, %v478
        %481 = vst [vmem:[%s215] sm:$0x3] %v480
        %v482 = vpack.c.bf16 %v454, %v453
        %v483 = vpack.c.bf16 %v456, %v455
        %v486 = vunpack.c.l.b16 %v482
        %v487 = vunpack.c.h.b16 %v482
        %v488 = vunpack.c.l.b16 %v483
        %v489 = vunpack.c.h.b16 %v483
        %v490 = vpack.c.b16 %v486, %v486
        %v491 = vpack.c.b16 %v487, %v487
        %v492 = vpack.c.b16 %v488, %v488
        %v493 = vpack.c.b16 %v489, %v489
        %498 = vst [vmem:[%s208] sm:$0xf] %v490
        %499 = vst [vmem:[%s208 + $0x4] sm:$0xf] %v491
        %500 = vst [vmem:[%s208 + $0x8] sm:$0xf] %v492
        %501 = vst [vmem:[%s208 + $0xc] sm:$0xf] %v493
        %s502 = sand.u32 %s80, 1
        %s503 = scalar_lea.sflag [#allocation4], %s502
        %s504 = sand.u32 %s80, 1
        %s505 = smul.addr %s504, 16
        %s506 = scalar_lea.vmem [#allocation7], %s505
        %s507 = sand.u32 %s106, 1
        %s508 = scalar_lea.sflag [#allocation9], %s507
        %s509 = sand.u32 %s106, 1
        %s510 = smul.addr %s509, 2
        %s511 = scalar_lea.vmem [#allocation8], %s510
        // Predicated region
        $region37: #{tpu_custom_call.1} parent=27 // pred_check
          %p512 = pneg %p90
        $region38: #{tpu_custom_call.1} parent=27 // pred_check_branch
          %514 = sbr.rel (%p512) target = $region40
        $region39: #{tpu_custom_call.1} parent=27 // pred_region
          %s515 = smul.u32 4, %s25
          %s517 = ssub.s32 256, 256
          %518 = vsyncadd %s503, %s517
          %s519 = smul.addr %s515, 64
          %s520 = scalar_lea.hbm %s2, %s519
          %s521 = sshll.u32 %s506, 4
          %s522 = int_to_ptr.vmem [resolvable:$true] %s521
          %527 = dma.vmem_to_hbm [thread:$0]  %s522, 256, %s520, %s503, 64, 64, 4
        $region40: #{tpu_custom_call.1} parent=27 // pred_fallthru
          _
        // Predicated region
        $region41: #{tpu_custom_call.1} parent=27 // pred_check
          %p528 = pneg %p116
        $region42: #{tpu_custom_call.1} parent=27 // pred_check_branch
          %530 = sbr.rel (%p528) target = $region44
        $region43: #{tpu_custom_call.1} parent=27 // pred_region
          %s532 = ssub.s32 32, 32
          %533 = vsyncadd %s508, %s532
          %s534 = smul.addr %s25, 32
          %s535 = scalar_lea.hbm %s3, %s534
          %s537 = sshll.u32 %s511, 4
          %s538 = int_to_ptr.vmem [resolvable:$true] %s537
          %540 = dma.vmem_to_hbm [thread:$0]  %s538, 32, %s535, %s508
        $region44: #{tpu_custom_call.1} parent=27 // pred_fallthru
          _
      $region28: #{tpu_custom_call.1} parent=5 // pred_fallthru
        _
      %p541 = scmp.le.s32.totalorder 2, %s20
      // Predicated region
      $region45: #{tpu_custom_call.1} parent=5 // pred_check
        %p542 = pneg %p541
      $region46: #{tpu_custom_call.1} parent=5 // pred_check_branch
        %544 = sbr.rel (%p542) target = $region48
      $region47: #{tpu_custom_call.1} parent=5 // pred_region
        %s545 = ssub.s32 %s20, 2
        // Predicated region
        $region49: #{tpu_custom_call.1} parent=47 // pred_check
          %p546 = pneg %p96
        $region50: #{tpu_custom_call.1} parent=47 // pred_check_branch
          %548 = sbr.rel (%p546) target = $region52
        $region51: #{tpu_custom_call.1} parent=47 // pred_region
          %s549 = sand.u32 %s81, 1
          %s550 = scalar_lea.sflag [#allocation4], %s549
          %s551 = sand.u32 %s81, 1
          %s552 = smul.addr %s551, 16
          %s553 = scalar_lea.vmem [#allocation7], %s552
          %554 = dma.done %s550, 256
        $region52: #{tpu_custom_call.1} parent=47 // pred_fallthru
          _
        // Predicated region
        $region53: #{tpu_custom_call.1} parent=47 // pred_check
          %p555 = pneg %p122
        $region54: #{tpu_custom_call.1} parent=47 // pred_check_branch
          %557 = sbr.rel (%p555) target = $region56
        $region55: #{tpu_custom_call.1} parent=47 // pred_region
          %s558 = sand.u32 %s107, 1
          %s559 = scalar_lea.sflag [#allocation9], %s558
          %s560 = sand.u32 %s107, 1
          %s561 = smul.addr %s560, 2
          %s562 = scalar_lea.vmem [#allocation8], %s561
          %563 = dma.done %s559, 32
        $region56: #{tpu_custom_call.1} parent=47 // pred_fallthru
          _
      $region48: #{tpu_custom_call.1} parent=5 // pred_fallthru
        _
    $region6: #{tpu_custom_call.1} parent=1 // loop_footer
      %s24 = sadd.s32 1, %s20
    $region7: #{tpu_custom_call.1} parent=1 // loop_footer_branch
      %19 = sbr.rel target = $region3
    $region8: #{tpu_custom_call.1} parent=1 // loop_exit
      _
    %564 = vsyncpa [#allocation3], 1
    %s565 = scalar_lea.sflag [#allocation3], 1
    %566 = vsyncpa %s565, 1
    %567 = vsyncpa [#allocation6], 1
    %568 = vsyncpa [#allocation4], 1
    %s569 = scalar_lea.sflag [#allocation4], 1
    %570 = vsyncpa %s569, 1
    %571 = vsyncpa [#allocation9], 1
    %s572 = scalar_lea.sflag [#allocation9], 1
    %573 = vsyncpa %s572, 1

</llo_original>
